<compile_context>
chip_gen: v5e
topology: v5e:2x2
jax: 0.10.0
libtpu: 0.0.40
codegen_flags: <defaults>
</compile_context>

<pallas_src>
import jax
import jax.numpy as jnp
import numpy as np
from jax.experimental import pallas as pl
from jax.experimental.pallas import tpu as pltpu

BN_EPS = 1e-5
DIST_EPS = 1e-8
_MASK_DIST = 1e30          # f32 sentinel used to mask already-selected neighbors


def _fp_kernel(u_ref, kn_ref, uf_ref, a_ref, w1u_ref, b1_ref, w2_ref, b2_ref, out_ref):
    """One (batch, query-tile): three_nn + fused three_interpolate/conv1 + conv2 (BN folded)."""
    u = u_ref[0]            # (3, TN)    query xyz, channel-major
    kn = kn_ref[0]          # (m, 3)     source xyz, native layout
    uf = uf_ref[0]          # (C1, TN)   features at queries (channel-major)
    a = a_ref[0]            # (c1o, m)   fused (s1*W1_interp) @ known_feats_b
    m = kn.shape[0]
    tn = u.shape[1]

    # ---- pairwise squared distances (m, TN): exact coordinate-wise sum (matches the
    #      reference numerics); d initialized from the first coordinate (no zeros pass) ----
    diff = kn[:, 0:1] - u[0:1, :]                               # (m,1) - (1,TN) -> (m,TN)
    d = diff * diff
    for c in (1, 2):
        diff = kn[:, c:c + 1] - u[c:c + 1, :]
        d = d + diff * diff

    ridx = jax.lax.broadcasted_iota(jnp.int32, (m, tn), 0)      # source index per row

    def _select(dcur):
        mv = jnp.min(dcur, axis=0, keepdims=True)               # (1, TN) min dist^2
        cand = jnp.where(dcur == mv, ridx, jnp.int32(m))        # (m, TN)
        amin = jnp.min(cand, axis=0, keepdims=True)             # lowest-index argmin
        sel = ridx == amin                                      # exactly-one-hot per column
        recip = 1.0 / (jnp.sqrt(jnp.maximum(mv, 0.0)) + DIST_EPS)
        return sel, recip

    # ---- fused three_nn: accumulate the unnormalized (m, TN) weight matrix.  First
    #      pass initializes wacc/norm directly; a row is never re-selected so plain
    #      where() overwrites are enough; d is NOT re-masked after the final pass. ----
    sel, recip = _select(d)
    wacc = jnp.where(sel, recip, 0.0)                           # (m, TN) f32
    norm = recip                                                # (1, TN)
    for _ in range(2):
        d = jnp.where(sel, jnp.float32(_MASK_DIST), d)
        sel, recip = _select(d)
        wacc = jnp.where(sel, recip, wacc)
        norm = norm + recip

    # ---- fused three_interpolate + first conv (BN scale already folded into a/w1u):
    #      h1 = relu((A @ wacc) * (1/norm) + W1u @ uf + b1) ----
    inv = 1.0 / norm                                            # exact division, (1, TN)
    h = jnp.dot(a, wacc, preferred_element_type=jnp.float32) * inv          # (c1o, TN)
    h = h + jnp.dot(w1u_ref[...], uf, preferred_element_type=jnp.float32)
    h = jnp.maximum(h + b1_ref[...], 0.0)

    # ---- second conv (scale folded), shift + ReLU ----
    h = jnp.dot(w2_ref[...], h, preferred_element_type=jnp.float32)         # (c2o, TN)
    out_ref[0] = jnp.maximum(h + b2_ref[...], 0.0)


def _rup(x, k):
    return -(-int(x) // k) * k


def _padded_bytes(r, c):
    """f32 VMEM footprint of an (r, c) 2-D block after (8, 128) tiling/padding."""
    return 4 * _rup(max(int(r), 1), 8) * _rup(max(int(c), 1), 128)


def _vmem_estimate(tn, m, C1, c1o, c2o):
    """Honest per-grid-step VMEM estimate (padded blocks, double buffering, live temps)."""
    # double-buffered I/O blocks (incl. the lane-padded (m, 3) `known` block)
    io = 2 * (_padded_bytes(3, tn) + _padded_bytes(m, 3) + _padded_bytes(C1, tn)
              + _padded_bytes(c1o, m) + _padded_bytes(c2o, tn))
    # double-buffered weight / shift operands
    w = 2 * (_padded_bytes(c1o, C1) + _padded_bytes(c1o, 1)
             + _padded_bytes(c2o, c1o) + _padded_bytes(c2o, 1))
    # ~8 live (m, TN)-sized f32/i32 temporaries (d, diff, ridx, cand, sel, wacc + copies)
    # + the small (c*, TN) activations
    tmp = (8 * _padded_bytes(m, tn)
           + 2 * _padded_bytes(c1o, tn) + _padded_bytes(c2o, tn))
    return io + w + tmp


def _plan(n, m, B, C1, c1o, c2o):
    """Generation-aware n-tile + vmem_limit: query device VMEM, keep headroom."""
    try:
        cap = int(getattr(pltpu.get_tpu_info(), "vmem_capacity_bytes", 64 * 1024 * 1024))
    except Exception:
        cap = 64 * 1024 * 1024                      # conservative (v7x-sized) fallback
    cap = max(cap, 32 * 1024 * 1024)
    budget = cap - 12 * 1024 * 1024                 # headroom for compiler scratch

    # candidate tile widths: multiples of 128 below n (partial last tile is fine —
    # all ops are per-query-column), plus the full-n tile.
    cands = [t for t in (8192, 4096, 2048, 1024, 512, 256, 128) if t < n]
    if B > 1 or n <= 128:
        # when B == 1 and n > 128, force >= 2 tiles so both v7x TensorCores get work
        cands = [n] + cands
    if not cands:
        cands = [n]

    tn = cands[-1]
    for t in cands:
        if _vmem_estimate(t, m, C1, c1o, c2o) <= budget:
            tn = t
            break
    est = _vmem_estimate(tn, m, C1, c1o, c2o)
    vmem_limit = int(min(max(2 * est, 32 * 1024 * 1024), cap - 8 * 1024 * 1024))
    return tn, vmem_limit


def pointnet_fp_forward(unknown, known, unknow_feats, known_feats, params):
    """Pallas wrapper. Returns (B, mlp[-1], n) matching the PyTorch module."""
    B, n, _ = unknown.shape
    m = known.shape[1]
    C1 = unknow_feats.shape[1]
    C2 = known_feats.shape[1]

    (w1, s1, b1), (w2, s2, b2) = params              # w: (Cout, Cin); s, b: (Cout, 1)
    c1o = w1.shape[0]
    c2o = w2.shape[0]

    # Fold eval-mode BN scales into the conv weights (exact; scale is per out-channel).
    w1s = (w1 * s1).astype(jnp.float32)              # (c1o, C2 + C1)
    w1_kf = w1s[:, :C2]                              # part acting on interpolated feats
    w1_uf = w1s[:, C2:]                              # part acting on unknow_feats
    w2s = (w2 * s2).astype(jnp.float32)              # (c2o, c1o)

    # Fuse three_interpolate with the first conv: A_b = (s1*W1_kf) @ known_feats_b.
    A = jnp.einsum('oc,bcm->bom', w1_kf, known_feats.astype(jnp.float32),
                   precision=jax.lax.Precision.HIGHEST)          # (B, c1o, m)

    # Only the tiny xyz transpose of the queries; feature tensors stay channel-major.
    unknown_t = jnp.transpose(unknown, (0, 2, 1)).astype(jnp.float32)    # (B, 3, n)
    known_f = known.astype(jnp.float32)                                  # (B, m, 3)
    uf = unknow_feats.astype(jnp.float32)                                # (B, C1, n)

    tn, vmem_limit = _plan(n, m, B, C1, c1o, c2o)
    n_tiles = pl.cdiv(n, tn)

    out = pl.pallas_call(
        _fp_kernel,
        out_shape=jax.ShapeDtypeStruct((B, c2o, n), jnp.float32),
        grid=(B, n_tiles),
        in_specs=[
            pl.BlockSpec((1, 3, tn), lambda b, t: (b, 0, t)),     # unknown^T   (B,3,n)
            pl.BlockSpec((1, m, 3), lambda b, t: (b, 0, 0)),      # known       (B,m,3)
            pl.BlockSpec((1, C1, tn), lambda b, t: (b, 0, t)),    # unknow_feats (B,C1,n)
            pl.BlockSpec((1, c1o, m), lambda b, t: (b, 0, 0)),    # fused A     (B,c1o,m)
            pl.BlockSpec((c1o, C1), lambda b, t: (0, 0)),         # s1*W1 (uf part)
            pl.BlockSpec((c1o, 1), lambda b, t: (0, 0)),          # BN1 shift
            pl.BlockSpec((c2o, c1o), lambda b, t: (0, 0)),        # s2*W2
            pl.BlockSpec((c2o, 1), lambda b, t: (0, 0)),          # BN2 shift
        ],
        out_specs=pl.BlockSpec((1, c2o, tn), lambda b, t: (b, 0, t)),
        compiler_params=pltpu.CompilerParams(
            dimension_semantics=("parallel", "parallel"),
            vmem_limit_bytes=vmem_limit),
    )(unknown_t, known_f, uf, A, w1_uf, b1, w2s, b2)

    return out   # already (B, mlp[-1], n)


def make_params(key, mlp):
    """Deterministic synthetic params. Conv2d(k=1, bias=False) + BatchNorm2d per layer.

    BN is eval-mode (running stats) folded into scale/shift.  Returns kernel-ready
    params (W (Cout,Cin), scale (Cout,1), shift (Cout,1)) and raw params for the ref.
    """
    kernel_params = []
    raw_params = []
    for i in range(len(mlp) - 1):
        cin, cout = mlp[i], mlp[i + 1]
        key, k_w, k_g, k_b, k_m, k_v = jax.random.split(key, 6)
        W = jax.random.normal(k_w, (cout, cin), jnp.float32) * 0.2
        gamma = 1.0 + 0.1 * jax.random.normal(k_g, (cout,), jnp.float32)
        beta = 0.1 * jax.random.normal(k_b, (cout,), jnp.float32)
        mean = 0.1 * jax.random.normal(k_m, (cout,), jnp.float32)
        var = 1.0 + 0.1 * jax.random.uniform(k_v, (cout,), jnp.float32)
        scale = gamma / jnp.sqrt(var + BN_EPS)
        shift = beta - mean * scale
        kernel_params.append((W, scale.reshape(cout, 1), shift.reshape(cout, 1)))
        raw_params.append((W, gamma, beta, mean, var))
    return kernel_params, raw_params


def reference_forward(unknown, known, unknow_feats, known_feats, raw_params):
    """Pure-JAX reference mirroring the PyTorch module (eval-mode BN)."""
    d2 = jnp.sum((unknown[:, :, None, :] - known[:, None, :, :]) ** 2, axis=-1)   # (B,n,m)
    vals, idx = jax.lax.top_k(-d2, 3)                                             # 3 nearest
    dist = jnp.sqrt(jnp.maximum(-vals, 0.0))
    recip = 1.0 / (dist + DIST_EPS)
    weight = recip / jnp.sum(recip, axis=2, keepdims=True)                        # (B,n,3)
    gathered = jnp.take_along_axis(known_feats[:, :, None, :],
                                   idx[:, None, :, :], axis=3)                    # (B,C2,n,3)
    interp = jnp.sum(gathered * weight[:, None, :, :], axis=3)                    # (B,C2,n)
    h = jnp.concatenate([interp, unknow_feats], axis=1)                           # (B,C,n)
    for (W, gamma, beta, mean, var) in raw_params:
        h = jnp.einsum('oc,bcn->bon', W, h)
        scale = gamma / jnp.sqrt(var + BN_EPS)
        shift = beta - mean * scale
        h = h * scale[None, :, None] + shift[None, :, None]
        h = jnp.maximum(h, 0.0)
    return h


if __name__ == "__main__":
    B, n, m = 2, 16, 8
    C1, C2 = 4, 6
    mlp = [C1 + C2, 16, 8]

    key = jax.random.PRNGKey(0)
    k1, k2, k3, k4, k5 = jax.random.split(key, 5)
    unknown = jax.random.normal(k1, (B, n, 3), jnp.float32)          # query xyz
    known = jax.random.normal(k2, (B, m, 3), jnp.float32)            # source xyz
    unknow_feats = jax.random.normal(k3, (B, C1, n), jnp.float32)    # features at queries
    known_feats = jax.random.normal(k4, (B, C2, m), jnp.float32)     # features to propagate

    kernel_params, raw_params = make_params(k5, mlp)

    out = pointnet_fp_forward(unknown, known, unknow_feats, known_feats, kernel_params)
    out = jax.block_until_ready(out)

    ref = reference_forward(unknown, known, unknow_feats, known_feats, raw_params)
    ref = jax.block_until_ready(ref)

    assert out.shape == (B, mlp[-1], n), out.shape
    np.testing.assert_allclose(np.asarray(out), np.asarray(ref), rtol=1e-4, atol=1e-4)

    print("KERNEL_OK")
</pallas_src>

<mosaic_0001>
module attributes {stable_mosaic.version = 11 : i64} {
  func.func @_fp_kernel(%arg0: i32, %arg1: i32, %arg2: memref<1x3x16xf32, #tpu.memory_space<vmem>>, %arg3: memref<1x8x3xf32, #tpu.memory_space<vmem>>, %arg4: memref<1x4x16xf32, #tpu.memory_space<vmem>>, %arg5: memref<1x16x8xf32, #tpu.memory_space<vmem>>, %arg6: memref<16x4xf32, #tpu.memory_space<vmem>>, %arg7: memref<16x1xf32, #tpu.memory_space<vmem>>, %arg8: memref<8x16xf32, #tpu.memory_space<vmem>>, %arg9: memref<8x1xf32, #tpu.memory_space<vmem>>, %arg10: memref<1x8x16xf32, #tpu.memory_space<vmem>>) attributes {dimension_semantics = [#tpu.dimension_semantics<parallel>, #tpu.dimension_semantics<parallel>], iteration_bounds = array<i64: 2, 1>, scalar_prefetch = 0 : i64, scratch_operands = 0 : i64, tpu.core_type = #tpu.core_type<tc>, window_params = [{transform_indices = @transform_0, window_bounds = array<i64: 1, 3, 16>}, {transform_indices = @transform_1, window_bounds = array<i64: 1, 8, 3>}, {transform_indices = @transform_2, window_bounds = array<i64: 1, 4, 16>}, {transform_indices = @transform_3, window_bounds = array<i64: 1, 16, 8>}, {pipeline_mode = #tpu.pipeline_mode<synchronous>, transform_indices = @transform_4, window_bounds = array<i64: 16, 4>}, {pipeline_mode = #tpu.pipeline_mode<synchronous>, transform_indices = @transform_5, window_bounds = array<i64: 16, 1>}, {pipeline_mode = #tpu.pipeline_mode<synchronous>, transform_indices = @transform_6, window_bounds = array<i64: 8, 16>}, {pipeline_mode = #tpu.pipeline_mode<synchronous>, transform_indices = @transform_7, window_bounds = array<i64: 8, 1>}, {transform_indices = @transform_8, window_bounds = array<i64: 1, 8, 16>}]} {
    %c0 = arith.constant 0 : index
    %c0_0 = arith.constant 0 : index
    %c0_1 = arith.constant 0 : index
    %0 = vector.load %arg2[%c0, %c0_0, %c0_1] : memref<1x3x16xf32, #tpu.memory_space<vmem>>, vector<1x3x16xf32>
    %1 = vector.shape_cast %0 : vector<1x3x16xf32> to vector<3x16xf32>
    %c0_2 = arith.constant 0 : index
    %c0_3 = arith.constant 0 : index
    %c0_4 = arith.constant 0 : index
    %2 = vector.load %arg3[%c0_2, %c0_3, %c0_4] : memref<1x8x3xf32, #tpu.memory_space<vmem>>, vector<1x8x3xf32>
    %3 = vector.shape_cast %2 : vector<1x8x3xf32> to vector<8x3xf32>
    %c0_5 = arith.constant 0 : index
    %c0_6 = arith.constant 0 : index
    %c0_7 = arith.constant 0 : index
    %4 = vector.load %arg4[%c0_5, %c0_6, %c0_7] : memref<1x4x16xf32, #tpu.memory_space<vmem>>, vector<1x4x16xf32>
    %5 = vector.shape_cast %4 : vector<1x4x16xf32> to vector<4x16xf32>
    %c0_8 = arith.constant 0 : index
    %c0_9 = arith.constant 0 : index
    %c0_10 = arith.constant 0 : index
    %6 = vector.load %arg5[%c0_8, %c0_9, %c0_10] : memref<1x16x8xf32, #tpu.memory_space<vmem>>, vector<1x16x8xf32>
    %7 = vector.shape_cast %6 : vector<1x16x8xf32> to vector<16x8xf32>
    %8 = vector.extract_strided_slice %3 {offsets = [0, 0], sizes = [8, 1], strides = [1, 1]} : vector<8x3xf32> to vector<8x1xf32>
    %9 = vector.extract_strided_slice %1 {offsets = [0, 0], sizes = [1, 16], strides = [1, 1]} : vector<3x16xf32> to vector<1x16xf32>
    %10 = vector.broadcast %8 : vector<8x1xf32> to vector<8x16xf32>
    %11 = vector.broadcast %9 : vector<1x16xf32> to vector<8x16xf32>
    %12 = arith.subf %10, %11 : vector<8x16xf32>
    %13 = arith.mulf %12, %12 : vector<8x16xf32>
    %14 = vector.extract_strided_slice %3 {offsets = [0, 1], sizes = [8, 1], strides = [1, 1]} : vector<8x3xf32> to vector<8x1xf32>
    %15 = vector.extract_strided_slice %1 {offsets = [1, 0], sizes = [1, 16], strides = [1, 1]} : vector<3x16xf32> to vector<1x16xf32>
    %16 = vector.broadcast %14 : vector<8x1xf32> to vector<8x16xf32>
    %17 = vector.broadcast %15 : vector<1x16xf32> to vector<8x16xf32>
    %18 = arith.subf %16, %17 : vector<8x16xf32>
    %19 = arith.mulf %18, %18 : vector<8x16xf32>
    %20 = arith.addf %13, %19 : vector<8x16xf32>
    %21 = vector.extract_strided_slice %3 {offsets = [0, 2], sizes = [8, 1], strides = [1, 1]} : vector<8x3xf32> to vector<8x1xf32>
    %22 = vector.extract_strided_slice %1 {offsets = [2, 0], sizes = [1, 16], strides = [1, 1]} : vector<3x16xf32> to vector<1x16xf32>
    %23 = vector.broadcast %21 : vector<8x1xf32> to vector<8x16xf32>
    %24 = vector.broadcast %22 : vector<1x16xf32> to vector<8x16xf32>
    %25 = arith.subf %23, %24 : vector<8x16xf32>
    %26 = arith.mulf %25, %25 : vector<8x16xf32>
    %27 = arith.addf %20, %26 : vector<8x16xf32>
    %28 = tpu.iota {dimensions = array<i32: 0>} : vector<8x16xi32>
    %cst = arith.constant dense<0x7F800000> : vector<16xf32>
    %29 = vector.multi_reduction <minimumf>, %27, %cst [0] : vector<8x16xf32> to vector<16xf32>
    %30 = vector.shape_cast %29 : vector<16xf32> to vector<1x16xf32>
    %31 = vector.broadcast %30 : vector<1x16xf32> to vector<8x16xf32>
    %32 = arith.cmpf oeq, %27, %31 : vector<8x16xf32>
    %c8_i32 = arith.constant 8 : i32
    %33 = vector.broadcast %c8_i32 : i32 to vector<8x16xi32>
    %34 = arith.select %32, %28, %33 : vector<8x16xi1>, vector<8x16xi32>
    %cst_11 = arith.constant dense<2147483647> : vector<16xi32>
    %35 = vector.multi_reduction <minsi>, %34, %cst_11 [0] : vector<8x16xi32> to vector<16xi32>
    %36 = vector.shape_cast %35 : vector<16xi32> to vector<1x16xi32>
    %37 = vector.broadcast %36 : vector<1x16xi32> to vector<8x16xi32>
    %38 = arith.cmpi eq, %28, %37 : vector<8x16xi32>
    %cst_12 = arith.constant 0.000000e+00 : f32
    %39 = vector.broadcast %cst_12 : f32 to vector<1x16xf32>
    %40 = arith.maximumf %30, %39 : vector<1x16xf32>
    %41 = math.sqrt %40 : vector<1x16xf32>
    %cst_13 = arith.constant 9.99999993E-9 : f32
    %42 = vector.broadcast %cst_13 : f32 to vector<1x16xf32>
    %43 = arith.addf %41, %42 : vector<1x16xf32>
    %cst_14 = arith.constant 1.000000e+00 : f32
    %44 = vector.broadcast %cst_14 : f32 to vector<1x16xf32>
    %45 = arith.divf %44, %43 : vector<1x16xf32>
    %cst_15 = arith.constant 0.000000e+00 : f32
    %46 = vector.shape_cast %45 : vector<1x16xf32> to vector<1x16xf32>
    %47 = vector.broadcast %46 : vector<1x16xf32> to vector<8x16xf32>
    %48 = vector.broadcast %cst_15 : f32 to vector<8x16xf32>
    %49 = arith.select %38, %47, %48 : vector<8x16xi1>, vector<8x16xf32>
    %cst_16 = arith.constant 1.000000e+30 : f32
    %50 = vector.broadcast %cst_16 : f32 to vector<8x16xf32>
    %51 = arith.select %38, %50, %27 : vector<8x16xi1>, vector<8x16xf32>
    %cst_17 = arith.constant dense<0x7F800000> : vector<16xf32>
    %52 = vector.multi_reduction <minimumf>, %51, %cst_17 [0] : vector<8x16xf32> to vector<16xf32>
    %53 = vector.shape_cast %52 : vector<16xf32> to vector<1x16xf32>
    %54 = vector.broadcast %53 : vector<1x16xf32> to vector<8x16xf32>
    %55 = arith.cmpf oeq, %51, %54 : vector<8x16xf32>
    %c8_i32_18 = arith.constant 8 : i32
    %56 = vector.broadcast %c8_i32_18 : i32 to vector<8x16xi32>
    %57 = arith.select %55, %28, %56 : vector<8x16xi1>, vector<8x16xi32>
    %cst_19 = arith.constant dense<2147483647> : vector<16xi32>
    %58 = vector.multi_reduction <minsi>, %57, %cst_19 [0] : vector<8x16xi32> to vector<16xi32>
    %59 = vector.shape_cast %58 : vector<16xi32> to vector<1x16xi32>
    %60 = vector.broadcast %59 : vector<1x16xi32> to vector<8x16xi32>
    %61 = arith.cmpi eq, %28, %60 : vector<8x16xi32>
    %cst_20 = arith.constant 0.000000e+00 : f32
    %62 = vector.broadcast %cst_20 : f32 to vector<1x16xf32>
    %63 = arith.maximumf %53, %62 : vector<1x16xf32>
    %64 = math.sqrt %63 : vector<1x16xf32>
    %cst_21 = arith.constant 9.99999993E-9 : f32
    %65 = vector.broadcast %cst_21 : f32 to vector<1x16xf32>
    %66 = arith.addf %64, %65 : vector<1x16xf32>
    %cst_22 = arith.constant 1.000000e+00 : f32
    %67 = vector.broadcast %cst_22 : f32 to vector<1x16xf32>
    %68 = arith.divf %67, %66 : vector<1x16xf32>
    %69 = vector.shape_cast %68 : vector<1x16xf32> to vector<1x16xf32>
    %70 = vector.broadcast %69 : vector<1x16xf32> to vector<8x16xf32>
    %71 = arith.select %61, %70, %49 : vector<8x16xi1>, vector<8x16xf32>
    %72 = arith.addf %45, %68 : vector<1x16xf32>
    %cst_23 = arith.constant 1.000000e+30 : f32
    %73 = vector.broadcast %cst_23 : f32 to vector<8x16xf32>
    %74 = arith.select %61, %73, %51 : vector<8x16xi1>, vector<8x16xf32>
    %cst_24 = arith.constant dense<0x7F800000> : vector<16xf32>
    %75 = vector.multi_reduction <minimumf>, %74, %cst_24 [0] : vector<8x16xf32> to vector<16xf32>
    %76 = vector.shape_cast %75 : vector<16xf32> to vector<1x16xf32>
    %77 = vector.broadcast %76 : vector<1x16xf32> to vector<8x16xf32>
    %78 = arith.cmpf oeq, %74, %77 : vector<8x16xf32>
    %c8_i32_25 = arith.constant 8 : i32
    %79 = vector.broadcast %c8_i32_25 : i32 to vector<8x16xi32>
    %80 = arith.select %78, %28, %79 : vector<8x16xi1>, vector<8x16xi32>
    %cst_26 = arith.constant dense<2147483647> : vector<16xi32>
    %81 = vector.multi_reduction <minsi>, %80, %cst_26 [0] : vector<8x16xi32> to vector<16xi32>
    %82 = vector.shape_cast %81 : vector<16xi32> to vector<1x16xi32>
    %83 = vector.broadcast %82 : vector<1x16xi32> to vector<8x16xi32>
    %84 = arith.cmpi eq, %28, %83 : vector<8x16xi32>
    %cst_27 = arith.constant 0.000000e+00 : f32
    %85 = vector.broadcast %cst_27 : f32 to vector<1x16xf32>
    %86 = arith.maximumf %76, %85 : vector<1x16xf32>
    %87 = math.sqrt %86 : vector<1x16xf32>
    %cst_28 = arith.constant 9.99999993E-9 : f32
    %88 = vector.broadcast %cst_28 : f32 to vector<1x16xf32>
    %89 = arith.addf %87, %88 : vector<1x16xf32>
    %cst_29 = arith.constant 1.000000e+00 : f32
    %90 = vector.broadcast %cst_29 : f32 to vector<1x16xf32>
    %91 = arith.divf %90, %89 : vector<1x16xf32>
    %92 = vector.shape_cast %91 : vector<1x16xf32> to vector<1x16xf32>
    %93 = vector.broadcast %92 : vector<1x16xf32> to vector<8x16xf32>
    %94 = arith.select %84, %93, %71 : vector<8x16xi1>, vector<8x16xf32>
    %95 = arith.addf %72, %91 : vector<1x16xf32>
    %cst_30 = arith.constant 1.000000e+00 : f32
    %96 = vector.broadcast %cst_30 : f32 to vector<1x16xf32>
    %97 = arith.divf %96, %95 : vector<1x16xf32>
    %cst_31 = arith.constant dense<0.000000e+00> : vector<16x16xf32>
    %98 = tpu.matmul %7, %94, %cst_31 {dimension_numbers = #tpu.dot_dimension_numbers<[1], [0], [0], [1], [0, 0, 1, 1], [], []>} : vector<16x8xf32>, vector<8x16xf32>, vector<16x16xf32> -> vector<16x16xf32>
    %99 = vector.broadcast %97 : vector<1x16xf32> to vector<16x16xf32>
    %100 = arith.mulf %98, %99 : vector<16x16xf32>
    %c0_32 = arith.constant 0 : index
    %c0_33 = arith.constant 0 : index
    %101 = vector.load %arg6[%c0_32, %c0_33] : memref<16x4xf32, #tpu.memory_space<vmem>>, vector<16x4xf32>
    %cst_34 = arith.constant dense<0.000000e+00> : vector<16x16xf32>
    %102 = tpu.matmul %101, %5, %cst_34 {dimension_numbers = #tpu.dot_dimension_numbers<[1], [0], [0], [1], [0, 0, 1, 1], [], []>} : vector<16x4xf32>, vector<4x16xf32>, vector<16x16xf32> -> vector<16x16xf32>
    %103 = arith.addf %100, %102 : vector<16x16xf32>
    %c0_35 = arith.constant 0 : index
    %c0_36 = arith.constant 0 : index
    %104 = vector.load %arg7[%c0_35, %c0_36] : memref<16x1xf32, #tpu.memory_space<vmem>>, vector<16x1xf32>
    %105 = vector.broadcast %104 : vector<16x1xf32> to vector<16x16xf32>
    %106 = arith.addf %103, %105 : vector<16x16xf32>
    %cst_37 = arith.constant 0.000000e+00 : f32
    %107 = vector.broadcast %cst_37 : f32 to vector<16x16xf32>
    %108 = arith.maximumf %106, %107 : vector<16x16xf32>
    %c0_38 = arith.constant 0 : index
    %c0_39 = arith.constant 0 : index
    %109 = vector.load %arg8[%c0_38, %c0_39] : memref<8x16xf32, #tpu.memory_space<vmem>>, vector<8x16xf32>
    %cst_40 = arith.constant dense<0.000000e+00> : vector<8x16xf32>
    %110 = tpu.matmul %109, %108, %cst_40 {dimension_numbers = #tpu.dot_dimension_numbers<[1], [0], [0], [1], [0, 0, 1, 1], [], []>} : vector<8x16xf32>, vector<16x16xf32>, vector<8x16xf32> -> vector<8x16xf32>
    %c0_41 = arith.constant 0 : index
    %c0_42 = arith.constant 0 : index
    %111 = vector.load %arg9[%c0_41, %c0_42] : memref<8x1xf32, #tpu.memory_space<vmem>>, vector<8x1xf32>
    %112 = vector.broadcast %111 : vector<8x1xf32> to vector<8x16xf32>
    %113 = arith.addf %110, %112 : vector<8x16xf32>
    %cst_43 = arith.constant 0.000000e+00 : f32
    %114 = vector.broadcast %cst_43 : f32 to vector<8x16xf32>
    %115 = arith.maximumf %113, %114 : vector<8x16xf32>
    %c0_44 = arith.constant 0 : index
    %c0_45 = arith.constant 0 : index
    %c0_46 = arith.constant 0 : index
    %116 = vector.load %arg10[%c0_44, %c0_45, %c0_46] : memref<1x8x16xf32, #tpu.memory_space<vmem>>, vector<1x8x16xf32>
    %117 = vector.shape_cast %116 : vector<1x8x16xf32> to vector<8x16xf32>
    %118 = vector.shape_cast %115 : vector<8x16xf32> to vector<1x8x16xf32>
    tpu.vector_store %arg10[%c0_44, %c0_45, %c0_46], %118 {strides = array<i32>} : memref<1x8x16xf32, #tpu.memory_space<vmem>>, vector<1x8x16xf32>,
    return
  }
  func.func @transform_0(%arg0: i32, %arg1: i32) -> (i32, i32, i32) {
    %c0_i32 = arith.constant 0 : i32
    %c0_i32_0 = arith.constant 0 : i32
    return %arg0, %c0_i32, %arg1 : i32, i32, i32
  }
  func.func @transform_1(%arg0: i32, %arg1: i32) -> (i32, i32, i32) {
    %c0_i32 = arith.constant 0 : i32
    %c0_i32_0 = arith.constant 0 : i32
    %c0_i32_1 = arith.constant 0 : i32
    return %arg0, %c0_i32, %c0_i32_0 : i32, i32, i32
  }
  func.func @transform_2(%arg0: i32, %arg1: i32) -> (i32, i32, i32) {
    %c0_i32 = arith.constant 0 : i32
    %c0_i32_0 = arith.constant 0 : i32
    return %arg0, %c0_i32, %arg1 : i32, i32, i32
  }
  func.func @transform_3(%arg0: i32, %arg1: i32) -> (i32, i32, i32) {
    %c0_i32 = arith.constant 0 : i32
    %c0_i32_0 = arith.constant 0 : i32
    %c0_i32_1 = arith.constant 0 : i32
    return %arg0, %c0_i32, %c0_i32_0 : i32, i32, i32
  }
  func.func @transform_4(%arg0: i32, %arg1: i32) -> (i32, i32) {
    %c0_i32 = arith.constant 0 : i32
    %c0_i32_0 = arith.constant 0 : i32
    %c0_i32_1 = arith.constant 0 : i32
    return %c0_i32, %c0_i32_0 : i32, i32
  }
  func.func @transform_5(%arg0: i32, %arg1: i32) -> (i32, i32) {
    %c0_i32 = arith.constant 0 : i32
    %c0_i32_0 = arith.constant 0 : i32
    %c0_i32_1 = arith.constant 0 : i32
    return %c0_i32, %c0_i32_0 : i32, i32
  }
  func.func @transform_6(%arg0: i32, %arg1: i32) -> (i32, i32) {
    %c0_i32 = arith.constant 0 : i32
    %c0_i32_0 = arith.constant 0 : i32
    %c0_i32_1 = arith.constant 0 : i32
    return %c0_i32, %c0_i32_0 : i32, i32
  }
  func.func @transform_7(%arg0: i32, %arg1: i32) -> (i32, i32) {
    %c0_i32 = arith.constant 0 : i32
    %c0_i32_0 = arith.constant 0 : i32
    %c0_i32_1 = arith.constant 0 : i32
    return %c0_i32, %c0_i32_0 : i32, i32
  }
  func.func @transform_8(%arg0: i32, %arg1: i32) -> (i32, i32, i32) {
    %c0_i32 = arith.constant 0 : i32
    %c0_i32_0 = arith.constant 0 : i32
    return %arg0, %c0_i32, %arg1 : i32, i32, i32
  }
}

</mosaic_0001>

<llo_original>
// kernel: tpu_custom_call.1
$region0: #{tpu_custom_call.1}
  #allocation0 [shape = 'u32[]', space=smem, size = 0x4, offset = 0x4, fixed_abs, tag = 'smem constant byte address 0x4 - core index']
  #allocation1 [shape = 'u32[72,128]{1,0:T(1,128)}', space=vmem, size = 0x9000, scoped, tag = 'internal scratch']
  %s0 = inlined_call_operand.vmem [shape: f32[2,3,16], index: 0, kind: input, shape index: {}]
  %s1 = inlined_call_operand.vmem [shape: f32[2,8,3], index: 1, kind: input, shape index: {}]
  %s2 = inlined_call_operand.vmem [shape: f32[2,4,16], index: 2, kind: input, shape index: {}]
  %s3 = inlined_call_operand.vmem [shape: f32[2,16,8], index: 3, kind: input, shape index: {}]
  %s4 = inlined_call_operand.vmem [shape: f32[16,4], index: 4, kind: input, shape index: {}]
  %s5 = inlined_call_operand.vmem [shape: f32[16,1], index: 5, kind: input, shape index: {}]
  %s6 = inlined_call_operand.vmem [shape: f32[8,16], index: 6, kind: input, shape index: {}]
  %s7 = inlined_call_operand.vmem [shape: f32[8,1], index: 7, kind: input, shape index: {}]
  %s8 = inlined_call_operand.hbm [shape: f32[2,8,16], index: 8, kind: output, shape index: {}]
  %s9 = sld [smem:[#allocation0]]
  $region65: #{tpu_custom_call.1} parent=0
    _
  %s11 = ssub.s32 1, %s9
  %s12 = scalar_select 0, %s11, %s9
  $region1: #{tpu_custom_call.1} parent=0
    #allocation2 [shape = 'u8[8192]{0}', space=vmem, size = 0x2000, scoped, tag = 'output window, operand 0']
    #allocation3 [shape = 's32[2]{0}', space=sflag, size = 0x8, scoped, tag = 'scoped memory for tpu_custom_call.1']
    %13 = vsyncpa [#allocation3], 0
    %s14 = scalar_lea.sflag [#allocation3], 1
    %15 = vsyncpa %s14, 0
    loop: start=0, step=1, limit=4
    $region2: #{tpu_custom_call.1} parent=1 // loop_pre_header
      _
    $region3: #{tpu_custom_call.1} parent=1 // loop_header
      %s17 = sphi 0, %s21
      %p18 = scmp.ge.s32.totalorder %s17, 4
      %s24 = sphi 0, %s36
      %s25 = sphi 0, %s32
      %s26 = sphi 0, %s24
      %s27 = sphi 0, %s25
      %s28 = sphi 0, %s26
      %s29 = sphi 0, %s27
      %s41 = sphi 0, %s43
      %s44 = sphi 0, %s41
      %s45 = sphi 0, %s44
      %s61 = sphi 0, %s45
      %s67 = sphi 0, %s69
      %s70 = sphi 0, %s67
      %s71 = sphi 0, %s70
      %s87 = sphi 0, %s71
      %s95 = sphi 0, %s97
      %s98 = sphi 0, %s95
      %s99 = sphi 0, %s98
      %s115 = sphi 0, %s99
      %s121 = sphi 0, %s123
      %s124 = sphi 0, %s121
      %s125 = sphi 0, %s124
      %s141 = sphi 0, %s125
      %s145 = sphi 0, %s145
      %s147 = sphi 0, %s145
      %s148 = sphi 0, %s147
      %s162 = sphi 0, %s148
      %s166 = sphi 0, %s166
      %s168 = sphi 0, %s166
      %s169 = sphi 0, %s168
      %s183 = sphi 0, %s169
      %s187 = sphi 0, %s187
      %s189 = sphi 0, %s187
      %s190 = sphi 0, %s189
      %s204 = sphi 0, %s190
      %s208 = sphi 0, %s208
      %s210 = sphi 0, %s208
      %s211 = sphi 0, %s210
      %s225 = sphi 0, %s211
      %s233 = sphi 0, %s235
      %s236 = sphi 0, %s233
      %s237 = sphi 0, %s236
      %s253 = sphi 0, %s237
    $region4: #{tpu_custom_call.1} parent=1 // loop_header_branch
      %20 = sbr.rel (%p18) target = $region8
    $region5: #{tpu_custom_call.1} parent=1 // loop_body
      %s22 = ssub.s32 %s17, 1
      %s23 = ssub.s32 %s17, 2
      %s30 = sadd.s32 1, %s25
      %p31 = scmp.ge.s32.totalorder %s30, 1
      %s32 = scalar_select %p31, 0, %s30
      %s33 = sadd.s32 1, %s24
      %s34 = scalar_select %p31, %s33, %s24
      %p35 = scmp.ge.s32.totalorder %s34, 2
      %s36 = scalar_select %p35, 0, %s34
      %s37 = ssub.s32 %s24, %s36
      %s38 = ssub.s32 %s25, %s32
      %s39 = sor.u32 %s37, %s38
      %p40 = scmp.eq.s32.totalorder %s39, 0
      %s42 = sadd.s32 %s41, 1
      %s43 = scalar_select %p40, %s41, %s42
      %p46 = pneg %p40
      %p47 = scmp.eq.s32.totalorder %s17, 1
      %p48 = por %p46, %p47
      %p49 = scmp.ne.s32.totalorder %s41, %s44
      %p50 = scmp.eq.s32.totalorder %s17, 0
      %p51 = por %p49, %p50
      %p52 = scmp.ne.s32.totalorder %s41, %s44
      %p53 = scmp.eq.s32.totalorder %s22, 1
      %p54 = por %p52, %p53
      %p55 = scmp.ne.s32.totalorder %s44, %s45
      %p56 = scmp.eq.s32.totalorder %s22, 0
      %p57 = por %p55, %p56
      %p58 = scmp.ne.s32.totalorder %s44, %s45
      %p59 = scmp.eq.s32.totalorder %s23, 1
      %p60 = por %p58, %p59
      %p62 = scmp.ne.s32.totalorder %s45, %s61
      %p63 = scmp.eq.s32.totalorder %s23, 0
      %p64 = por %p62, %p63
      %s65 = ssub.s32 %s24, %s36
      %p66 = scmp.eq.s32.totalorder %s65, 0
      %s68 = sadd.s32 %s67, 1
      %s69 = scalar_select %p66, %s67, %s68
      %p72 = pneg %p66
      %p73 = scmp.eq.s32.totalorder %s17, 1
      %p74 = por %p72, %p73
      %p75 = scmp.ne.s32.totalorder %s67, %s70
      %p76 = scmp.eq.s32.totalorder %s17, 0
      %p77 = por %p75, %p76
      %p78 = scmp.ne.s32.totalorder %s67, %s70
      %p79 = scmp.eq.s32.totalorder %s22, 1
      %p80 = por %p78, %p79
      %p81 = scmp.ne.s32.totalorder %s70, %s71
      %p82 = scmp.eq.s32.totalorder %s22, 0
      %p83 = por %p81, %p82
      %p84 = scmp.ne.s32.totalorder %s70, %s71
      %p85 = scmp.eq.s32.totalorder %s23, 1
      %p86 = por %p84, %p85
      %p88 = scmp.ne.s32.totalorder %s71, %s87
      %p89 = scmp.eq.s32.totalorder %s23, 0
      %p90 = por %p88, %p89
      %s91 = ssub.s32 %s24, %s36
      %s92 = ssub.s32 %s25, %s32
      %s93 = sor.u32 %s91, %s92
      %p94 = scmp.eq.s32.totalorder %s93, 0
      %s96 = sadd.s32 %s95, 1
      %s97 = scalar_select %p94, %s95, %s96
      %p100 = pneg %p94
      %p101 = scmp.eq.s32.totalorder %s17, 1
      %p102 = por %p100, %p101
      %p103 = scmp.ne.s32.totalorder %s95, %s98
      %p104 = scmp.eq.s32.totalorder %s17, 0
      %p105 = por %p103, %p104
      %p106 = scmp.ne.s32.totalorder %s95, %s98
      %p107 = scmp.eq.s32.totalorder %s22, 1
      %p108 = por %p106, %p107
      %p109 = scmp.ne.s32.totalorder %s98, %s99
      %p110 = scmp.eq.s32.totalorder %s22, 0
      %p111 = por %p109, %p110
      %p112 = scmp.ne.s32.totalorder %s98, %s99
      %p113 = scmp.eq.s32.totalorder %s23, 1
      %p114 = por %p112, %p113
      %p116 = scmp.ne.s32.totalorder %s99, %s115
      %p117 = scmp.eq.s32.totalorder %s23, 0
      %p118 = por %p116, %p117
      %s119 = ssub.s32 %s24, %s36
      %p120 = scmp.eq.s32.totalorder %s119, 0
      %s122 = sadd.s32 %s121, 1
      %s123 = scalar_select %p120, %s121, %s122
      %p126 = pneg %p120
      %p127 = scmp.eq.s32.totalorder %s17, 1
      %p128 = por %p126, %p127
      %p129 = scmp.ne.s32.totalorder %s121, %s124
      %p130 = scmp.eq.s32.totalorder %s17, 0
      %p131 = por %p129, %p130
      %p132 = scmp.ne.s32.totalorder %s121, %s124
      %p133 = scmp.eq.s32.totalorder %s22, 1
      %p134 = por %p132, %p133
      %p135 = scmp.ne.s32.totalorder %s124, %s125
      %p136 = scmp.eq.s32.totalorder %s22, 0
      %p137 = por %p135, %p136
      %p138 = scmp.ne.s32.totalorder %s124, %s125
      %p139 = scmp.eq.s32.totalorder %s23, 1
      %p140 = por %p138, %p139
      %p142 = scmp.ne.s32.totalorder %s125, %s141
      %p143 = scmp.eq.s32.totalorder %s23, 0
      %p144 = por %p142, %p143
      %s146 = sadd.s32 %s145, 1
      %p149 = scmp.eq.s32.totalorder %s17, 1
      %p150 = scmp.ne.s32.totalorder %s145, %s147
      %p151 = scmp.eq.s32.totalorder %s17, 0
      %p152 = por %p150, %p151
      %p153 = scmp.ne.s32.totalorder %s145, %s147
      %p154 = scmp.eq.s32.totalorder %s22, 1
      %p155 = por %p153, %p154
      %p156 = scmp.ne.s32.totalorder %s147, %s148
      %p157 = scmp.eq.s32.totalorder %s22, 0
      %p158 = por %p156, %p157
      %p159 = scmp.ne.s32.totalorder %s147, %s148
      %p160 = scmp.eq.s32.totalorder %s23, 1
      %p161 = por %p159, %p160
      %p163 = scmp.ne.s32.totalorder %s148, %s162
      %p164 = scmp.eq.s32.totalorder %s23, 0
      %p165 = por %p163, %p164
      %s167 = sadd.s32 %s166, 1
      %p170 = scmp.eq.s32.totalorder %s17, 1
      %p171 = scmp.ne.s32.totalorder %s166, %s168
      %p172 = scmp.eq.s32.totalorder %s17, 0
      %p173 = por %p171, %p172
      %p174 = scmp.ne.s32.totalorder %s166, %s168
      %p175 = scmp.eq.s32.totalorder %s22, 1
      %p176 = por %p174, %p175
      %p177 = scmp.ne.s32.totalorder %s168, %s169
      %p178 = scmp.eq.s32.totalorder %s22, 0
      %p179 = por %p177, %p178
      %p180 = scmp.ne.s32.totalorder %s168, %s169
      %p181 = scmp.eq.s32.totalorder %s23, 1
      %p182 = por %p180, %p181
      %p184 = scmp.ne.s32.totalorder %s169, %s183
      %p185 = scmp.eq.s32.totalorder %s23, 0
      %p186 = por %p184, %p185
      %s188 = sadd.s32 %s187, 1
      %p191 = scmp.eq.s32.totalorder %s17, 1
      %p192 = scmp.ne.s32.totalorder %s187, %s189
      %p193 = scmp.eq.s32.totalorder %s17, 0
      %p194 = por %p192, %p193
      %p195 = scmp.ne.s32.totalorder %s187, %s189
      %p196 = scmp.eq.s32.totalorder %s22, 1
      %p197 = por %p195, %p196
      %p198 = scmp.ne.s32.totalorder %s189, %s190
      %p199 = scmp.eq.s32.totalorder %s22, 0
      %p200 = por %p198, %p199
      %p201 = scmp.ne.s32.totalorder %s189, %s190
      %p202 = scmp.eq.s32.totalorder %s23, 1
      %p203 = por %p201, %p202
      %p205 = scmp.ne.s32.totalorder %s190, %s204
      %p206 = scmp.eq.s32.totalorder %s23, 0
      %p207 = por %p205, %p206
      %s209 = sadd.s32 %s208, 1
      %p212 = scmp.eq.s32.totalorder %s17, 1
      %p213 = scmp.ne.s32.totalorder %s208, %s210
      %p214 = scmp.eq.s32.totalorder %s17, 0
      %p215 = por %p213, %p214
      %p216 = scmp.ne.s32.totalorder %s208, %s210
      %p217 = scmp.eq.s32.totalorder %s22, 1
      %p218 = por %p216, %p217
      %p219 = scmp.ne.s32.totalorder %s210, %s211
      %p220 = scmp.eq.s32.totalorder %s22, 0
      %p221 = por %p219, %p220
      %p222 = scmp.ne.s32.totalorder %s210, %s211
      %p223 = scmp.eq.s32.totalorder %s23, 1
      %p224 = por %p222, %p223
      %p226 = scmp.ne.s32.totalorder %s211, %s225
      %p227 = scmp.eq.s32.totalorder %s23, 0
      %p228 = por %p226, %p227
      %s229 = ssub.s32 %s24, %s36
      %s230 = ssub.s32 %s25, %s32
      %s231 = sor.u32 %s229, %s230
      %p232 = scmp.eq.s32.totalorder %s231, 0
      %s234 = sadd.s32 %s233, 1
      %s235 = scalar_select %p232, %s233, %s234
      %p238 = pneg %p232
      %p239 = scmp.eq.s32.totalorder %s17, 1
      %p240 = por %p238, %p239
      %p241 = scmp.ne.s32.totalorder %s233, %s236
      %p242 = scmp.eq.s32.totalorder %s17, 0
      %p243 = por %p241, %p242
      %p244 = scmp.ne.s32.totalorder %s233, %s236
      %p245 = scmp.eq.s32.totalorder %s22, 1
      %p246 = por %p244, %p245
      %p247 = scmp.ne.s32.totalorder %s236, %s237
      %p248 = scmp.eq.s32.totalorder %s22, 0
      %p249 = por %p247, %p248
      %p250 = scmp.ne.s32.totalorder %s236, %s237
      %p251 = scmp.eq.s32.totalorder %s23, 1
      %p252 = por %p250, %p251
      %p254 = scmp.ne.s32.totalorder %s237, %s253
      %p255 = scmp.eq.s32.totalorder %s23, 0
      %p256 = por %p254, %p255
      %p257 = scmp.le.s32.totalorder 1, %s17
      %p258 = scmp.lt.s32.totalorder %s17, 3
      %p259 = pnand %p257, %p258
      %p260 = pneg %p259
      // Predicated region
      $region9: #{tpu_custom_call.1} parent=5 // pred_check
        _
      $region10: #{tpu_custom_call.1} parent=5 // pred_check_branch
        %262 = sbr.rel (%p259) target = $region12
      $region11: #{tpu_custom_call.1} parent=5 // pred_region
        %s263 = ssub.s32 %s17, 1
        // Predicated region
        $region13: #{tpu_custom_call.1} parent=11 // pred_check
          %p264 = pneg %p158
        $region14: #{tpu_custom_call.1} parent=11 // pred_check_branch
          %266 = sbr.rel (%p264) target = $region16
        $region15: #{tpu_custom_call.1} parent=11 // pred_region
          _
        $region16: #{tpu_custom_call.1} parent=11 // pred_fallthru
          _
        // Predicated region
        $region17: #{tpu_custom_call.1} parent=11 // pred_check
          %p267 = pneg %p179
        $region18: #{tpu_custom_call.1} parent=11 // pred_check_branch
          %269 = sbr.rel (%p267) target = $region20
        $region19: #{tpu_custom_call.1} parent=11 // pred_region
          _
        $region20: #{tpu_custom_call.1} parent=11 // pred_fallthru
          _
        // Predicated region
        $region21: #{tpu_custom_call.1} parent=11 // pred_check
          %p270 = pneg %p200
        $region22: #{tpu_custom_call.1} parent=11 // pred_check_branch
          %272 = sbr.rel (%p270) target = $region24
        $region23: #{tpu_custom_call.1} parent=11 // pred_region
          _
        $region24: #{tpu_custom_call.1} parent=11 // pred_fallthru
          _
        // Predicated region
        $region25: #{tpu_custom_call.1} parent=11 // pred_check
          %p273 = pneg %p221
        $region26: #{tpu_custom_call.1} parent=11 // pred_check_branch
          %275 = sbr.rel (%p273) target = $region28
        $region27: #{tpu_custom_call.1} parent=11 // pred_region
          _
        $region28: #{tpu_custom_call.1} parent=11 // pred_fallthru
          _
      $region12: #{tpu_custom_call.1} parent=5 // pred_fallthru
        _
      %p276 = scmp.lt.s32.totalorder %s17, 2
      // Predicated region
      $region29: #{tpu_custom_call.1} parent=5 // pred_check
        %p277 = pneg %p276
      $region30: #{tpu_custom_call.1} parent=5 // pred_check_branch
        %279 = sbr.rel (%p277) target = $region32
      $region31: #{tpu_custom_call.1} parent=5 // pred_region
        // Predicated region
        $region33: #{tpu_custom_call.1} parent=31 // pred_check
          %p280 = pneg %p51
        $region34: #{tpu_custom_call.1} parent=31 // pred_check_branch
          %282 = sbr.rel (%p280) target = $region36
        $region35: #{tpu_custom_call.1} parent=31 // pred_region
          %p283 = scmp.lt.s32.totalorder %s24, 1
          %s284 = scalar_select %p283, %s24, 1
          %p285 = scmp.lt.s32.totalorder %s25, 0
          %s286 = scalar_select %p285, %s25, 0
          %s287 = sadd.s32 %s286, %s284
          %s288 = smul.addr %s287, 4
          %s289 = scalar_lea.vmem %s0, %s288
        $region36: #{tpu_custom_call.1} parent=31 // pred_fallthru
          _
        // Predicated region
        $region37: #{tpu_custom_call.1} parent=31 // pred_check
          %p290 = pneg %p77
        $region38: #{tpu_custom_call.1} parent=31 // pred_check_branch
          %292 = sbr.rel (%p290) target = $region40
        $region39: #{tpu_custom_call.1} parent=31 // pred_region
          %p293 = scmp.lt.s32.totalorder %s24, 1
          %s294 = scalar_select %p293, %s24, 1
          %s295 = smul.addr %s294, 8
          %s296 = scalar_lea.vmem %s1, %s295
        $region40: #{tpu_custom_call.1} parent=31 // pred_fallthru
          _
        // Predicated region
        $region41: #{tpu_custom_call.1} parent=31 // pred_check
          %p297 = pneg %p105
        $region42: #{tpu_custom_call.1} parent=31 // pred_check_branch
          %299 = sbr.rel (%p297) target = $region44
        $region43: #{tpu_custom_call.1} parent=31 // pred_region
          %p300 = scmp.lt.s32.totalorder %s24, 1
          %s301 = scalar_select %p300, %s24, 1
          %p302 = scmp.lt.s32.totalorder %s25, 0
          %s303 = scalar_select %p302, %s25, 0
          %s304 = sadd.s32 %s303, %s301
          %s305 = smul.addr %s304, 4
          %s306 = scalar_lea.vmem %s2, %s305
        $region44: #{tpu_custom_call.1} parent=31 // pred_fallthru
          _
        // Predicated region
        $region45: #{tpu_custom_call.1} parent=31 // pred_check
          %p307 = pneg %p131
        $region46: #{tpu_custom_call.1} parent=31 // pred_check_branch
          %309 = sbr.rel (%p307) target = $region48
        $region47: #{tpu_custom_call.1} parent=31 // pred_region
          %p310 = scmp.lt.s32.totalorder %s24, 1
          %s311 = scalar_select %p310, %s24, 1
          %s312 = smul.addr %s311, 2
          %s313 = smul.addr %s312, 8
          %s314 = scalar_lea.vmem %s3, %s313
        $region48: #{tpu_custom_call.1} parent=31 // pred_fallthru
          _
      $region32: #{tpu_custom_call.1} parent=5 // pred_fallthru
        _
      %p315 = scmp.le.s32.totalorder 1, %s17
      %p316 = scmp.lt.s32.totalorder %s17, 3
      %p317 = pnand %p315, %p316
      %p318 = pneg %p317
      // Predicated region
      $region49: #{tpu_custom_call.1} parent=5 // pred_check
        _
      $region50: #{tpu_custom_call.1} parent=5 // pred_check_branch
        %320 = sbr.rel (%p317) target = $region52
      $region51: #{tpu_custom_call.1} parent=5 // pred_region
        %s321 = ssub.s32 %s17, 1
        %p322 = scmp.lt.s32.totalorder %s26, 1
        %s323 = scalar_select %p322, %s26, 1
        %p324 = scmp.lt.s32.totalorder %s27, 0
        %s325 = scalar_select %p324, %s27, 0
        %s326 = sadd.s32 %s325, %s323
        %s327 = smul.addr %s326, 4
        %s328 = scalar_lea.vmem %s0, %s327
        %p329 = pneg %p57
        %p330 = pneg %p54
        %p331 = scmp.lt.s32.totalorder %s26, 1
        %s332 = scalar_select %p331, %s26, 1
        %s333 = smul.addr %s332, 8
        %s334 = scalar_lea.vmem %s1, %s333
        %p335 = pneg %p83
        %p336 = pneg %p80
        %p337 = scmp.lt.s32.totalorder %s26, 1
        %s338 = scalar_select %p337, %s26, 1
        %p339 = scmp.lt.s32.totalorder %s27, 0
        %s340 = scalar_select %p339, %s27, 0
        %s341 = sadd.s32 %s340, %s338
        %s342 = smul.addr %s341, 4
        %s343 = scalar_lea.vmem %s2, %s342
        %p344 = pneg %p111
        %p345 = pneg %p108
        %p346 = scmp.lt.s32.totalorder %s26, 1
        %s347 = scalar_select %p346, %s26, 1
        %s348 = smul.addr %s347, 2
        %s349 = smul.addr %s348, 8
        %s350 = scalar_lea.vmem %s3, %s349
        %p351 = pneg %p137
        %p352 = pneg %p134
        %p353 = pneg %p158
        %p354 = pneg %p155
        %p355 = pneg %p179
        %p356 = pneg %p176
        %p357 = pneg %p200
        %p358 = pneg %p197
        %p359 = pneg %p221
        %p360 = pneg %p218
        %p361 = pneg %p249
        %p362 = pneg %p246
        %s363 = sand.u32 %s236, 1
        %s364 = scalar_lea.sflag [#allocation3], %s363
        %s365 = sand.u32 %s236, 1
        %s366 = smul.addr %s365, 8
        %s367 = scalar_lea.vmem [#allocation2], %s366
        %p368 = scmp.lt.s32.totalorder %s26, 1
        %s369 = scalar_select %p368, %s26, 1
        %p370 = scmp.lt.s32.totalorder %s27, 0
        %s371 = scalar_select %p370, %s27, 0
        %s372 = sadd.s32 %s371, %s369
        %s373 = smul.addr %s372, 4
        %s374 = scalar_lea.vmem %s0, %s373
        %p375 = scmp.lt.s32.totalorder %s26, 1
        %s376 = scalar_select %p375, %s26, 1
        %s377 = smul.addr %s376, 8
        %s378 = scalar_lea.vmem %s1, %s377
        %p379 = scmp.lt.s32.totalorder %s26, 1
        %s380 = scalar_select %p379, %s26, 1
        %p381 = scmp.lt.s32.totalorder %s27, 0
        %s382 = scalar_select %p381, %s27, 0
        %s383 = sadd.s32 %s382, %s380
        %s384 = smul.addr %s383, 4
        %s385 = scalar_lea.vmem %s2, %s384
        %p386 = scmp.lt.s32.totalorder %s26, 1
        %s387 = scalar_select %p386, %s26, 1
        %s388 = smul.addr %s387, 2
        %s389 = smul.addr %s388, 8
        %s390 = scalar_lea.vmem %s3, %s389
        %v391 = vld [vmem:[%s374] sm:$0x7]
        %v392 = vld [vmem:[%s378] sm:$0xff]
        %v393 = vld [vmem:[%s385] sm:$0xf]
        %v394 = vld [vmem:[%s390] sm:$0xff]
        %v395 = vld [vmem:[%s390 + $0x8] sm:$0xff]
        %397 = vset.pattern.permute.xlu0 0
        %398 = vperm.xlu0 %397, %v392
        %v399 = vpop.permute.xlu0 %398
        %v401 = vperm.slane %v391, 0
        %v402 = vsub.f32 %v399, %v401
        %v403 = vmul.f32 %v402, %v402
        %404 = vset.pattern.permute.xlu0 1
        %405 = vperm.xlu0 %404, %v392
        %v406 = vpop.permute.xlu0 %405
        %v408 = vperm.slane %v391, 1
        %v409 = vsub.f32 %v406, %v408
        %v410 = vmul.f32 %v409, %v409
        %v411 = vadd.f32 %v403, %v410
        %412 = vset.pattern.permute.xlu0 2
        %413 = vperm.xlu0 %412, %v392
        %v414 = vpop.permute.xlu0 %413
        %v416 = vperm.slane %v391, 2
        %v417 = vsub.f32 %v414, %v416
        %v418 = vmul.f32 %v417, %v417
        %v419 = vadd.f32 %v411, %v418
        %v420 = vlaneseq
        %v421 = vshrl.u32 %v420, 7
        %vm422 = vcmask 130048
        %v423 = vsel %vm422, %v419, inf
        %v424 = vrot.slane %v423, 4
        %v425 = vmin.f32 %v423, %v424
        %v426 = vrot.slane %v425, 2
        %v427 = vmin.f32 %v425, %v426
        %v428 = vrot.slane %v427, 1
        %v429 = vmin.f32 %v427, %v428
        %vm430 = vcmp.eq.f32.partialorder %v419, %v429
        %v431 = vsel %vm430, %v421, 8
        %v432 = vsel %vm422, %v431, 2147483647
        %v433 = vrot.slane %v432, 4
        %vm434 = vcmp.lt.s32.totalorder %v432, %v433
        %v435 = vsel %vm434, %v432, %v433
        %v436 = vrot.slane %v435, 2
        %vm437 = vcmp.lt.s32.totalorder %v435, %v436
        %v438 = vsel %vm437, %v435, %v436
        %v439 = vrot.slane %v438, 1
        %vm440 = vcmp.lt.s32.totalorder %v438, %v439
        %v441 = vsel %vm440, %v438, %v439
        %vm442 = vcmp.eq.s32.totalorder %v421, %v441
        %v443 = vmax.f32 %v429, 0.0
        %v444 = vrsqrt.pop %v443
        %v445 = vmul.f32 %v444, %v443
        %v446 = vmul.f32 %v445, %v444
        %v447 = vmul.f32 0.5, %v446
        %v448 = vsub.f32 1.5, %v447
        %v449 = vmul.f32 %v444, %v448
        %v450 = vmul.f32 %v443, %v449
        %vm451 = vcmp.eq.f32.partialorder %v443, inf
        %v452 = vsel %vm451, %v443, %v450
        %vm453 = vcmp.eq.f32.partialorder %v443, 0.0
        %v454 = vand.u32 %v443, 2147483648
        %v455 = vsel %vm453, %v454, %v452
        %v456 = vadd.f32 %v455, 1e-08
        %v457 = vrcp.pop %v456
        %v458 = vmul.f32 %v456, %v457
        %v459 = vsub.f32 1.0, %v458
        %v460 = vmul.f32 %v457, %v459
        %v461 = vadd.f32 %v457, %v460
        %vm462 = vweird.f32 %v456
        %vm463 = vweird.f32 %v457
        %vm464 = vmor %vm462, %vm463
        %v465 = vsel %vm464, %v457, %v461
        %v466 = vand.u32 2147483647, %v456
        %vm467 = vcmp.eq.f32.partialorder %v466, 8.507059e+37
        %v468 = vand.u32 %v456, 2147483648
        %v469 = vor.u32 1.1754944e-38, %v468
        %v470 = vsel %vm467, %v469, %v465
        %v471 = vmul.f32 1.0, %v470
        %v472 = vsel %vm442, %v471, 0.0
        %v473 = vsel %vm442, 1e+30, %v419
        %v474 = vsel %vm422, %v473, inf
        %v475 = vrot.slane %v474, 4
        %v476 = vmin.f32 %v474, %v475
        %v477 = vrot.slane %v476, 2
        %v478 = vmin.f32 %v476, %v477
        %v479 = vrot.slane %v478, 1
        %v480 = vmin.f32 %v478, %v479
        %vm481 = vcmp.eq.f32.partialorder %v473, %v480
        %v482 = vsel %vm481, %v421, 8
        %v483 = vsel %vm422, %v482, 2147483647
        %v484 = vrot.slane %v483, 4
        %vm485 = vcmp.lt.s32.totalorder %v483, %v484
        %v486 = vsel %vm485, %v483, %v484
        %v487 = vrot.slane %v486, 2
        %vm488 = vcmp.lt.s32.totalorder %v486, %v487
        %v489 = vsel %vm488, %v486, %v487
        %v490 = vrot.slane %v489, 1
        %vm491 = vcmp.lt.s32.totalorder %v489, %v490
        %v492 = vsel %vm491, %v489, %v490
        %vm493 = vcmp.eq.s32.totalorder %v421, %v492
        %v494 = vmax.f32 %v480, 0.0
        %v495 = vrsqrt.pop %v494
        %v496 = vmul.f32 %v495, %v494
        %v497 = vmul.f32 %v496, %v495
        %v498 = vmul.f32 0.5, %v497
        %v499 = vsub.f32 1.5, %v498
        %v500 = vmul.f32 %v495, %v499
        %v501 = vmul.f32 %v494, %v500
        %vm502 = vcmp.eq.f32.partialorder %v494, inf
        %v503 = vsel %vm502, %v494, %v501
        %vm504 = vcmp.eq.f32.partialorder %v494, 0.0
        %v505 = vand.u32 %v494, 2147483648
        %v506 = vsel %vm504, %v505, %v503
        %v507 = vadd.f32 %v506, 1e-08
        %v508 = vrcp.pop %v507
        %v509 = vmul.f32 %v507, %v508
        %v510 = vsub.f32 1.0, %v509
        %v511 = vmul.f32 %v508, %v510
        %v512 = vadd.f32 %v508, %v511
        %vm513 = vweird.f32 %v507
        %vm514 = vweird.f32 %v508
        %vm515 = vmor %vm513, %vm514
        %v516 = vsel %vm515, %v508, %v512
        %v517 = vand.u32 2147483647, %v507
        %vm518 = vcmp.eq.f32.partialorder %v517, 8.507059e+37
        %v519 = vand.u32 %v507, 2147483648
        %v520 = vor.u32 1.1754944e-38, %v519
        %v521 = vsel %vm518, %v520, %v516
        %v522 = vmul.f32 1.0, %v521
        %v523 = vsel %vm493, %v522, %v472
        %v524 = vadd.f32 %v471, %v522
        %v525 = vsel %vm493, 1e+30, %v473
        %v526 = vsel %vm422, %v525, inf
        %v527 = vrot.slane %v526, 4
        %v528 = vmin.f32 %v526, %v527
        %v529 = vrot.slane %v528, 2
        %v530 = vmin.f32 %v528, %v529
        %v531 = vrot.slane %v530, 1
        %v532 = vmin.f32 %v530, %v531
        %vm533 = vcmp.eq.f32.partialorder %v525, %v532
        %v534 = vsel %vm533, %v421, 8
        %v535 = vsel %vm422, %v534, 2147483647
        %v536 = vrot.slane %v535, 4
        %vm537 = vcmp.lt.s32.totalorder %v535, %v536
        %v538 = vsel %vm537, %v535, %v536
        %v539 = vrot.slane %v538, 2
        %vm540 = vcmp.lt.s32.totalorder %v538, %v539
        %v541 = vsel %vm540, %v538, %v539
        %v542 = vrot.slane %v541, 1
        %vm543 = vcmp.lt.s32.totalorder %v541, %v542
        %v544 = vsel %vm543, %v541, %v542
        %vm545 = vcmp.eq.s32.totalorder %v421, %v544
        %v546 = vmax.f32 %v532, 0.0
        %v547 = vrsqrt.pop %v546
        %v548 = vmul.f32 %v547, %v546
        %v549 = vmul.f32 %v548, %v547
        %v550 = vmul.f32 0.5, %v549
        %v551 = vsub.f32 1.5, %v550
        %v552 = vmul.f32 %v547, %v551
        %v553 = vmul.f32 %v546, %v552
        %vm554 = vcmp.eq.f32.partialorder %v546, inf
        %v555 = vsel %vm554, %v546, %v553
        %vm556 = vcmp.eq.f32.partialorder %v546, 0.0
        %v557 = vand.u32 %v546, 2147483648
        %v558 = vsel %vm556, %v557, %v555
        %v559 = vadd.f32 %v558, 1e-08
        %v560 = vrcp.pop %v559
        %v561 = vmul.f32 %v559, %v560
        %v562 = vsub.f32 1.0, %v561
        %v563 = vmul.f32 %v560, %v562
        %v564 = vadd.f32 %v560, %v563
        %vm565 = vweird.f32 %v559
        %vm566 = vweird.f32 %v560
        %vm567 = vmor %vm565, %vm566
        %v568 = vsel %vm567, %v560, %v564
        %v569 = vand.u32 2147483647, %v559
        %vm570 = vcmp.eq.f32.partialorder %v569, 8.507059e+37
        %v571 = vand.u32 %v559, 2147483648
        %v572 = vor.u32 1.1754944e-38, %v571
        %v573 = vsel %vm570, %v572, %v568
        %v574 = vmul.f32 1.0, %v573
        %v575 = vsel %vm545, %v574, %v523
        %v576 = vadd.f32 %v524, %v574
        %v577 = vrcp.pop %v576
        %v578 = vmul.f32 %v576, %v577
        %v579 = vsub.f32 1.0, %v578
        %v580 = vmul.f32 %v577, %v579
        %v581 = vadd.f32 %v577, %v580
        %vm582 = vweird.f32 %v576
        %vm583 = vweird.f32 %v577
        %vm584 = vmor %vm582, %vm583
        %v585 = vsel %vm584, %v577, %v581
        %v586 = vand.u32 2147483647, %v576
        %vm587 = vcmp.eq.f32.partialorder %v586, 8.507059e+37
        %v588 = vand.u32 %v576, 2147483648
        %v589 = vor.u32 1.1754944e-38, %v588
        %v590 = vsel %vm587, %v589, %v585
        %v591 = vmul.f32 1.0, %v590
        %vm592 = vcmask 64512
        %v594 = vsel %vm592, %v394, 0
        %v597 = vsel %vm592, %v395, 0
        %599 = vmatpush.msra.mxu0 0.0
        %600 = vmatpush.msra.mxu0 0.0
        %601 = vmatpush.msra.mxu0 0.0
        %602 = vmatpush.msra.mxu0 0.0
        %603 = vmatpush.msra.mxu0 0.0
        %604 = vmatpush.msra.mxu0 0.0
        %605 = vmatpush.msra.mxu0 0.0
        %606 = vmatpush.msra.mxu0 0.0
        %607 = vmatpush.msra.mxu0 0.0
        %608 = vmatpush.msra.mxu0 0.0
        %609 = vmatpush.msra.mxu0 0.0
        %610 = vmatpush.msra.mxu0 0.0
        %611 = vmatpush.msra.mxu0 0.0
        %612 = vmatpush.msra.mxu0 0.0
        %613 = vmatpush.msra.mxu0 0.0
        %614 = vmatpush.msra.mxu0 %v575
        %615 = vmatmul.f32.gmra.mxu0 %v594
        %v616 = vpop.f32.mrf.mxu0
        %v617 = vadd.f32 0.0, %v616
        %618 = vmatmul.f32.gmra.mxu0 %v597
        %v619 = vpop.f32.mrf.mxu0
        %v620 = vadd.f32 0.0, %v619
        %621 = vdwg.mxu0
        %v622 = vmul.f32 %v617, %v591
        %v623 = vmul.f32 %v620, %v591
        %v624 = vld [vmem:[%s4] sm:$0xff]
        %v625 = vld [vmem:[%s4 + $0x8] sm:$0xff]
        %vm626 = vcmask 31744
        %v628 = vsel %vm626, %v624, 0
        %v631 = vsel %vm626, %v625, 0
        %vm633 = vcmask 1043456
        %v635 = vsel %vm633, %v393, 0
        %637 = vmatpush.msra.mxu0 0.0
        %638 = vmatpush.msra.mxu0 0.0
        %639 = vmatpush.msra.mxu0 0.0
        %640 = vmatpush.msra.mxu0 0.0
        %641 = vmatpush.msra.mxu0 0.0
        %642 = vmatpush.msra.mxu0 0.0
        %643 = vmatpush.msra.mxu0 0.0
        %644 = vmatpush.msra.mxu0 0.0
        %645 = vmatpush.msra.mxu0 0.0
        %646 = vmatpush.msra.mxu0 0.0
        %647 = vmatpush.msra.mxu0 0.0
        %648 = vmatpush.msra.mxu0 0.0
        %649 = vmatpush.msra.mxu0 0.0
        %650 = vmatpush.msra.mxu0 0.0
        %651 = vmatpush.msra.mxu0 0.0
        %652 = vmatpush.msra.mxu0 %v635
        %653 = vmatmul.f32.gmra.mxu0 %v628
        %v654 = vpop.f32.mrf.mxu0
        %v655 = vadd.f32 0.0, %v654
        %656 = vmatmul.f32.gmra.mxu0 %v631
        %v657 = vpop.f32.mrf.mxu0
        %v658 = vadd.f32 0.0, %v657
        %659 = vdwg.mxu0
        %v660 = vadd.f32 %v622, %v655
        %v661 = vadd.f32 %v623, %v658
        %v662 = vld [vmem:[%s5] sm:$0xff]
        %v663 = vld [vmem:[%s5 + $0x8] sm:$0xff]
        %665 = vset.pattern.permute.xlu0 0
        %666 = vperm.xlu0 %665, %v662
        %v667 = vpop.permute.xlu0 %666
        %670 = vset.pattern.permute.xlu0 0
        %671 = vperm.xlu0 %670, %v663
        %v672 = vpop.permute.xlu0 %671
        %v674 = vadd.f32 %v660, %v667
        %v675 = vadd.f32 %v661, %v672
        %v676 = vmax.f32 %v674, 0.0
        %v677 = vmax.f32 %v675, 0.0
        %v678 = vld [vmem:[%s6] sm:$0xff]
        %v679 = vld [vmem:[%s7] sm:$0xff]
        %681 = vset.pattern.permute.xlu0 0
        %682 = vperm.xlu0 %681, %v679
        %v683 = vpop.permute.xlu0 %682
        %v686 = vsel %vm422, %v678, 0
        %688 = vmatpush.msra.mxu0 0.0
        %689 = vmatpush.msra.mxu0 0.0
        %690 = vmatpush.msra.mxu0 0.0
        %691 = vmatpush.msra.mxu0 0.0
        %692 = vmatpush.msra.mxu0 0.0
        %693 = vmatpush.msra.mxu0 0.0
        %694 = vmatpush.msra.mxu0 0.0
        %695 = vmatpush.msra.mxu0 0.0
        %696 = vmatpush.msra.mxu0 0.0
        %697 = vmatpush.msra.mxu0 0.0
        %698 = vmatpush.msra.mxu0 0.0
        %699 = vmatpush.msra.mxu0 0.0
        %700 = vmatpush.msra.mxu0 0.0
        %701 = vmatpush.msra.mxu0 0.0
        %702 = vmatpush.msra.mxu0 %v677
        %703 = vmatpush.msra.mxu0 %v676
        %704 = vmatmul.f32.gmra.mxu0 %v686
        %v705 = vpop.f32.mrf.mxu0
        %v706 = vadd.f32 %v683, %v705
        %707 = vdwg.mxu0
        %v708 = vmax.f32 %v706, 0.0
        %709 = vst.msk [vmem:[%s367] sm:$0xff] %vm422, %v708
        %s710 = sand.u32 %s236, 1
        %s711 = scalar_lea.sflag [#allocation3], %s710
        %s712 = sand.u32 %s236, 1
        %s713 = smul.addr %s712, 8
        %s714 = scalar_lea.vmem [#allocation2], %s713
        // Predicated region
        $region53: #{tpu_custom_call.1} parent=51 // pred_check
          %p715 = pneg %p246
        $region54: #{tpu_custom_call.1} parent=51 // pred_check_branch
          %717 = sbr.rel (%p715) target = $region56
        $region55: #{tpu_custom_call.1} parent=51 // pred_region
          %719 = vsyncadd %s711, 0
          %s720 = sadd.s32 %s27, %s26
          %s721 = smul.addr %s720, 8
          %s722 = scalar_lea.hbm %s8, %s721
          %s724 = sshll.u32 %s714, 4
          %s725 = int_to_ptr.vmem [resolvable:$true] %s724
          %s726 = sshll.u32 %s722, 4
          %s727 = int_to_ptr.hbm [resolvable:$true] %s726
          %729 = dma.vmem_to_hbm [thread:$0]  %s725, 128, %s727, %s711
        $region56: #{tpu_custom_call.1} parent=51 // pred_fallthru
          _
      $region52: #{tpu_custom_call.1} parent=5 // pred_fallthru
        _
      %p730 = scmp.le.s32.totalorder 2, %s17
      // Predicated region
      $region57: #{tpu_custom_call.1} parent=5 // pred_check
        %p731 = pneg %p730
      $region58: #{tpu_custom_call.1} parent=5 // pred_check_branch
        %733 = sbr.rel (%p731) target = $region60
      $region59: #{tpu_custom_call.1} parent=5 // pred_region
        %s734 = ssub.s32 %s17, 2
        // Predicated region
        $region61: #{tpu_custom_call.1} parent=59 // pred_check
          %p735 = pneg %p252
        $region62: #{tpu_custom_call.1} parent=59 // pred_check_branch
          %737 = sbr.rel (%p735) target = $region64
        $region63: #{tpu_custom_call.1} parent=59 // pred_region
          %s738 = sand.u32 %s237, 1
          %s739 = scalar_lea.sflag [#allocation3], %s738
          %s740 = sand.u32 %s237, 1
          %s741 = smul.addr %s740, 8
          %s742 = scalar_lea.vmem [#allocation2], %s741
          %744 = dma.done %s739, 128
        $region64: #{tpu_custom_call.1} parent=59 // pred_fallthru
          _
      $region60: #{tpu_custom_call.1} parent=5 // pred_fallthru
        _
    $region6: #{tpu_custom_call.1} parent=1 // loop_footer
      %s21 = sadd.s32 1, %s17
    $region7: #{tpu_custom_call.1} parent=1 // loop_footer_branch
      %16 = sbr.rel target = $region3
    $region8: #{tpu_custom_call.1} parent=1 // loop_exit
      _
    %745 = vsyncpa [#allocation3], 1
    %s746 = scalar_lea.sflag [#allocation3], 1
    %747 = vsyncpa %s746, 1

</llo_original>
